<compile_context>
chip_gen: v5e
topology: v5e:2x2
jax: 0.10.0
libtpu: 0.0.40
codegen_flags: <defaults>
</compile_context>

<pallas_src>
import functools
import math

import jax
import jax.numpy as jnp
from jax import lax
from jax.experimental import pallas as pl
from jax.experimental.pallas import tpu as pltpu


def _round_up(x, m):
    return ((x + m - 1) // m) * m


def _cdiv(a, b):
    return -(-a // b)


def _vmem_capacity_bytes():
    """Per-core VMEM capacity; fall back to the smallest (v7x: 64 MiB)."""
    try:
        info = pltpu.get_tpu_info()
        cap = int(getattr(info, "vmem_capacity_bytes", 0))
        if cap > 0:
            return cap
    except Exception:
        pass
    return 64 * 1024 * 1024


def _working_set_bytes(tm, tn, d_pad, esize, use_hard, resident_keys):
    """Real VMEM working-set model for the loss kernel (review item)."""
    kbuf = 1 if resident_keys else 2          # Buffered(1) when keys are resident
    need = 2 * tm * d_pad * esize             # query tile, double-buffered
    need += kbuf * tn * d_pad * esize         # key tile(s)
    if use_hard:
        need += 2 * tm * tn                   # int8 hard-negative tiles
    need += 4 * tm * tn * 4                   # ~4 live f32 [TM, TN] slabs in-kernel
    need += (2 * tm + 2 * tn + 2 * tm + 4 * tm) * 4   # labels / out / accumulators
    return need


def _choose_tiles(n, d_pad, esize, use_hard):
    """Pick (tm, tn, nrt, nct, n_row_pad, n_col_pad, vmem_limit, budget)."""
    cap = _vmem_capacity_bytes()
    budget = int(cap * 0.60)                  # headroom for compiler scratch
    vmem_limit = int(cap * 0.80)

    n8 = _round_up(n, 8)

    # Row tile: 256 fills the MXU on every chip; balance tiles (multiples of
    # 64) so row-padding waste stays bounded just above a 256 boundary.
    if n8 <= 256:
        tm, nrt = n8, 1
    else:
        nrt = _cdiv(n8, 256)
        tm = _round_up(_cdiv(n8, nrt), 64)
    n_row_pad = nrt * tm

    # Column tiles: prefer fully-resident keys (single col tile, Buffered(1));
    # otherwise stream key-column blocks flash-style so VMEM stays O(TM*TN).
    n_col128 = _round_up(n, 128)
    if _working_set_bytes(tm, n_col128, d_pad, esize, use_hard, True) <= budget:
        tn, nct = n_col128, 1
    else:
        tn, nct = None, None
        for cand in (4096, 2048, 1024, 512, 256, 128):
            if cand >= n_col128:
                continue
            if _working_set_bytes(tm, cand, d_pad, esize, use_hard, False) <= budget:
                nct = _cdiv(n_col128, cand)
                tn = _round_up(_cdiv(n_col128, nct), 128)   # balanced col tiles
                break
        if tn is None:                         # pathological: shrink the row tile too
            tm = 128 if tm > 128 else tm
            nrt = _cdiv(n8, tm)
            n_row_pad = nrt * tm
            tn = 128
            nct = _cdiv(n_col128, tn)
    n_col_pad = nct * tn

    return tm, tn, nrt, nct, n_row_pad, n_col_pad, vmem_limit, budget


def _pick_norm_tile(n_rows, d_pad, out_esize, in_esize, budget):
    """Normalize kernel is memory-bound: use the biggest row tile that fits."""
    per_row = 2 * d_pad * (in_esize + out_esize)   # double-buffered in + out
    cap_rows = max(8, (budget // per_row) // 8 * 8)
    return int(min(n_rows, 1024, cap_rows))


def _normalize_kernel(x_ref, o_ref, *, scale):
    """Row-wise L2 normalize, with sqrt(1/temperature) folded into the output."""
    x = x_ref[...].astype(jnp.float32)
    ssq = jnp.sum(x * x, axis=1, keepdims=True)
    # max(||x||, 1e-12) == sqrt(max(||x||^2, 1e-24)); rsqrt runs on the EUP.
    inv = lax.rsqrt(jnp.maximum(ssq, 1e-24)) * scale
    o_ref[...] = (x * inv).astype(o_ref.dtype)


def _loss_kernel(*refs, tm, tn, n_valid, n_col_pad, use_hard):
    if use_hard:
        (lab_col_ref, lab_row_ref, q_ref, k_ref, hard_ref,
         out_ref, m_sc, l_sc, ps_sc, pc_sc) = refs
    else:
        (lab_col_ref, lab_row_ref, q_ref, k_ref,
         out_ref, m_sc, l_sc, ps_sc, pc_sc) = refs
        hard_ref = None

    j = pl.program_id(1)

    @pl.when(j == 0)
    def _():
        m_sc[...] = jnp.full_like(m_sc, -1e30)
        l_sc[...] = jnp.zeros_like(l_sc)
        ps_sc[...] = jnp.zeros_like(ps_sc)
        pc_sc[...] = jnp.zeros_like(pc_sc)

    # [TM, TN] similarity on the MXU; 1/temperature is already folded into the
    # normalized operands.  Contract feature dims directly (A·Aᵀ, no transpose).
    sim = lax.dot_general(
        q_ref[...], k_ref[...],
        dimension_numbers=(((1,), (1,)), ((), ())),
        preferred_element_type=jnp.float32)

    row0 = pl.program_id(0) * tm
    col0 = j * tn
    row_ids = row0 + lax.broadcasted_iota(jnp.int32, (tm, 1), 0)    # (TM, 1)
    col_ids = col0 + lax.broadcasted_iota(jnp.int32, (1, tn), 1)    # (1, TN)
    # Positive-pair mask: same label AND not the diagonal ('!=' directly).
    pos_b = jnp.logical_and(lab_col_ref[...] == lab_row_ref[...],
                            row_ids != col_ids)

    has_pad_cols = n_col_pad > n_valid        # Python-static: skip passes if no pad
    if has_pad_cols:
        col_valid = col_ids < n_valid
        pos_b = jnp.logical_and(pos_b, col_valid)

    if use_hard:
        # Reference: weights = where(hard & negative, 2, 1); "negative" includes
        # the (zeroed) diagonal, which ~pos_b reproduces.
        boost = jnp.logical_and(hard_ref[...] != 0, jnp.logical_not(pos_b))
        sim = jnp.where(boost, 2.0 * sim, sim)

    if has_pad_cols:
        # Padded key rows are all-zero (sim 0, not -inf): keep them out of the
        # softmax denominator.  Safe only while sim stays f32.
        sim = jnp.where(col_valid, sim, -1e30)

    # Online log-sum-exp across key-column tiles; accumulators are (TM, 1).
    blk_max = jnp.max(sim, axis=1, keepdims=True)
    m_new = jnp.maximum(m_sc[...], blk_max)
    l_sc[...] = l_sc[...] * jnp.exp(m_sc[...] - m_new) + jnp.sum(
        jnp.exp(sim - m_new), axis=1, keepdims=True)
    m_sc[...] = m_new
    ps_sc[...] += jnp.sum(jnp.where(pos_b, sim, 0.0), axis=1, keepdims=True)
    pc_sc[...] += jnp.sum(pos_b.astype(jnp.float32), axis=1, keepdims=True)

    @pl.when(j == pl.num_programs(1) - 1)
    def _():
        # sum_pos(log_prob) = sum_pos(sim) - num_pos * (M + log(l + 1e-8)),
        # so no [TM, TN] log_prob slab is needed (review item).
        pc = pc_sc[...]
        log_den = m_sc[...] + jnp.log(l_sc[...] + 1e-8)
        out_ref[...] = (ps_sc[...] - pc * log_den) / jnp.maximum(pc, 1.0)


def contrastive_loss(embeddings, labels, hard_negatives_mask=None,
                     temperature=0.07, use_hard_negatives=True,
                     compute_dtype=jnp.bfloat16):
    """Pallas implementation of ContrastiveLoss.forward.

    embeddings: [N, D] float, labels: [N] int,
    hard_negatives_mask: optional [N, N] bool.  Returns scalar f32 loss.
    compute_dtype=float32 is the exact-parity escape hatch.
    """
    n, d = embeddings.shape
    apply_hard = bool(use_hard_negatives) and hard_negatives_mask is not None
    esize = jnp.dtype(compute_dtype).itemsize
    in_esize = jnp.dtype(embeddings.dtype).itemsize

    d_pad = _round_up(d, 128)                  # keep the MXU K dimension filled
    (tm, tn, nrt, nct, n_row_pad, n_col_pad,
     vmem_limit, budget) = _choose_tiles(n, d_pad, esize, apply_hard)

    # One normalized buffer big enough for both the query rows and key columns.
    n_buf0 = max(n_row_pad, n_col_pad)
    tm_norm = _pick_norm_tile(n_buf0, d_pad, esize, in_esize, budget)
    n_buf = _round_up(n_buf0, tm_norm)

    emb = embeddings
    if (n_buf, d_pad) != (n, d):
        emb = jnp.zeros((n_buf, d_pad), embeddings.dtype).at[:n, :d].set(embeddings)

    lab = labels.astype(jnp.int32)
    if n_row_pad != n:
        lab_col = jnp.full((n_row_pad, 1), -1, jnp.int32).at[:n, 0].set(lab)
    else:
        lab_col = lab.reshape(n, 1)
    if n_col_pad != n:
        lab_row = jnp.full((1, n_col_pad), -1, jnp.int32).at[0, :n].set(lab)
    else:
        lab_row = lab.reshape(1, n)

    cparams_1d = pltpu.CompilerParams(
        dimension_semantics=("parallel",), vmem_limit_bytes=vmem_limit)
    cparams_2d = pltpu.CompilerParams(
        dimension_semantics=("parallel", "arbitrary"), vmem_limit_bytes=vmem_limit)

    # Kernel 1: row-tiled L2 normalization with sqrt(1/T) folded in.
    scale = float(1.0 / math.sqrt(temperature))
    norm_emb = pl.pallas_call(
        functools.partial(_normalize_kernel, scale=scale),
        out_shape=jax.ShapeDtypeStruct((n_buf, d_pad), compute_dtype),
        grid=(n_buf // tm_norm,),
        in_specs=[pl.BlockSpec((tm_norm, d_pad), lambda i: (i, 0))],
        out_specs=pl.BlockSpec((tm_norm, d_pad), lambda i: (i, 0)),
        compiler_params=cparams_1d,
    )(emb)

    # Kernel 2: flash-style InfoNCE body over (row tiles x key-column tiles).
    single_buffer = (nct == 1) and hasattr(pl, "Buffered")
    if single_buffer:
        k_spec = pl.BlockSpec((tn, d_pad), lambda i, j: (j, 0),
                              pipeline_mode=pl.Buffered(1))
        lr_spec = pl.BlockSpec((1, tn), lambda i, j: (0, j),
                               pipeline_mode=pl.Buffered(1))
    else:
        k_spec = pl.BlockSpec((tn, d_pad), lambda i, j: (j, 0))
        lr_spec = pl.BlockSpec((1, tn), lambda i, j: (0, j))

    in_specs = [
        pl.BlockSpec((tm, 1), lambda i, j: (i, 0)),        # labels, row tile
        lr_spec,                                            # labels, key tile
        pl.BlockSpec((tm, d_pad), lambda i, j: (i, 0)),     # query tile
        k_spec,                                             # key tile(s)
    ]
    operands = [lab_col, lab_row, norm_emb, norm_emb]
    if apply_hard:
        hard_i8 = hard_negatives_mask.astype(jnp.int8)
        if (n_row_pad, n_col_pad) != (n, n):
            hard_i8 = jnp.zeros((n_row_pad, n_col_pad), jnp.int8).at[:n, :n].set(hard_i8)
        in_specs.append(pl.BlockSpec((tm, tn), lambda i, j: (i, j)))
        operands.append(hard_i8)

    kernel = functools.partial(
        _loss_kernel, tm=tm, tn=tn, n_valid=n, n_col_pad=n_col_pad,
        use_hard=apply_hard)

    mean_log_prob_pos = pl.pallas_call(
        kernel,
        out_shape=jax.ShapeDtypeStruct((n_row_pad, 1), jnp.float32),
        grid=(nrt, nct),
        in_specs=in_specs,
        out_specs=pl.BlockSpec((tm, 1), lambda i, j: (i, 0)),
        scratch_shapes=[pltpu.VMEM((tm, 1), jnp.float32) for _ in range(4)],
        compiler_params=cparams_2d,
    )(*operands)

    # Tiny epilogue kept in the wrapper: -mean over the N valid rows.
    return -jnp.mean(mean_log_prob_pos[:n, 0])


def _reference_loss(embeddings, labels, hard_negatives_mask=None,
                    temperature=0.07, use_hard_negatives=True,
                    compute_dtype=jnp.float32):
    """Pure-JAX reference mirroring the PyTorch module.

    compute_dtype=float32 -> faithful PyTorch f32 semantics.
    compute_dtype=bfloat16 -> mirrors the kernel's folded-scale bf16 matmul path.
    """
    e = embeddings.astype(jnp.float32)
    if compute_dtype == jnp.float32:
        e = e / jnp.maximum(jnp.linalg.norm(e, axis=1, keepdims=True), 1e-12)
        sim = jnp.dot(e, e.T, precision=lax.Precision.HIGHEST,
                      preferred_element_type=jnp.float32) / temperature
    else:
        scale = 1.0 / math.sqrt(temperature)
        inv = lax.rsqrt(jnp.maximum(jnp.sum(e * e, axis=1, keepdims=True), 1e-24))
        e = (e * (inv * scale)).astype(compute_dtype)
        sim = jnp.dot(e, e.T, preferred_element_type=jnp.float32).astype(jnp.float32)
    lab = labels.reshape(-1, 1)
    pos = (lab == lab.T).astype(jnp.float32)
    pos = pos * (1.0 - jnp.eye(e.shape[0], dtype=jnp.float32))
    if use_hard_negatives and hard_negatives_mask is not None:
        neg = 1.0 - pos
        w = jnp.where(hard_negatives_mask & (neg > 0.5), 2.0, 1.0)
        sim = sim * w
    sim = sim - jnp.max(sim, axis=1, keepdims=True)
    log_prob = sim - jnp.log(jnp.sum(jnp.exp(sim), axis=1, keepdims=True) + 1e-8)
    num_pos = jnp.maximum(pos.sum(axis=1), 1.0)
    mean_lp = (pos * log_prob).sum(axis=1) / num_pos
    return -mean_lp.mean()


if __name__ == "__main__":
    key = jax.random.PRNGKey(0)
    k_emb, k_lab, k_hard = jax.random.split(key, 3)

    N, D = 8, 32
    embeddings = jax.random.normal(k_emb, (N, D), dtype=jnp.float32)
    labels = jax.random.randint(k_lab, (N,), 0, 4, dtype=jnp.int32)
    hard_negatives_mask = jax.random.bernoulli(k_hard, 0.3, (N, N))

    # Default bf16-compute path with hard negatives.
    loss = contrastive_loss(embeddings, labels, hard_negatives_mask,
                            temperature=0.07, use_hard_negatives=True)
    loss = jax.block_until_ready(loss)
    assert bool(jnp.isfinite(loss)), loss

    ref_matched = _reference_loss(embeddings, labels, hard_negatives_mask,
                                  temperature=0.07, use_hard_negatives=True,
                                  compute_dtype=jnp.bfloat16)
    ref_f32 = _reference_loss(embeddings, labels, hard_negatives_mask,
                              temperature=0.07, use_hard_negatives=True,
                              compute_dtype=jnp.float32)
    assert jnp.allclose(loss, ref_matched, rtol=1e-2, atol=1e-2), (loss, ref_matched)
    assert jnp.allclose(loss, ref_f32, rtol=5e-2, atol=5e-2), (loss, ref_f32)

    # No-hard-negatives path (mask operand omitted entirely).
    loss_nh = contrastive_loss(embeddings, labels, None,
                               temperature=0.07, use_hard_negatives=True)
    loss_nh = jax.block_until_ready(loss_nh)
    ref_nh = _reference_loss(embeddings, labels, None,
                             temperature=0.07, use_hard_negatives=True,
                             compute_dtype=jnp.bfloat16)
    assert jnp.allclose(loss_nh, ref_nh, rtol=1e-2, atol=1e-2), (loss_nh, ref_nh)

    # f32 escape hatch (parity/regression path per the review notes).
    loss_f32 = contrastive_loss(embeddings, labels, hard_negatives_mask,
                                temperature=0.07, use_hard_negatives=True,
                                compute_dtype=jnp.float32)
    loss_f32 = jax.block_until_ready(loss_f32)
    assert jnp.allclose(loss_f32, ref_f32, rtol=2e-2, atol=2e-2), (loss_f32, ref_f32)

    print("KERNEL_OK")
</pallas_src>

<mosaic_0001>
module attributes {stable_mosaic.version = 11 : i64} {
  func.func @_normalize_kernel(%arg0: i32, %arg1: memref<128x128xf32, #tpu.memory_space<vmem>>, %arg2: memref<128x128xbf16, #tpu.memory_space<vmem>>) attributes {dimension_semantics = [#tpu.dimension_semantics<parallel>], iteration_bounds = array<i64: 1>, scalar_prefetch = 0 : i64, scratch_operands = 0 : i64, tpu.core_type = #tpu.core_type<tc>, window_params = [{transform_indices = @transform_0, window_bounds = array<i64: 128, 128>}, {transform_indices = @transform_1, window_bounds = array<i64: 128, 128>}]} {
    %c0 = arith.constant 0 : index
    %c0_0 = arith.constant 0 : index
    %0 = vector.load %arg1[%c0, %c0_0] : memref<128x128xf32, #tpu.memory_space<vmem>>, vector<128x128xf32>
    %1 = arith.mulf %0, %0 : vector<128x128xf32>
    %cst = arith.constant dense<0.000000e+00> : vector<128xf32>
    %2 = vector.multi_reduction <add>, %1, %cst [1] : vector<128x128xf32> to vector<128xf32>
    %3 = vector.shape_cast %2 : vector<128xf32> to vector<128x1xf32>
    %cst_1 = arith.constant 1.000000e-24 : f32
    %4 = vector.broadcast %cst_1 : f32 to vector<128x1xf32>
    %5 = arith.maximumf %3, %4 : vector<128x1xf32>
    %6 = math.rsqrt %5 : vector<128x1xf32>
    %cst_2 = arith.constant 3.77964473 : f32
    %7 = vector.broadcast %cst_2 : f32 to vector<128x1xf32>
    %8 = arith.mulf %6, %7 : vector<128x1xf32>
    %9 = vector.broadcast %8 : vector<128x1xf32> to vector<128x128xf32>
    %10 = arith.mulf %0, %9 : vector<128x128xf32>
    %11 = arith.truncf %10 : vector<128x128xf32> to vector<128x128xbf16>
    %c0_3 = arith.constant 0 : index
    %c0_4 = arith.constant 0 : index
    %12 = vector.load %arg2[%c0_3, %c0_4] : memref<128x128xbf16, #tpu.memory_space<vmem>>, vector<128x128xbf16>
    tpu.vector_store %arg2[%c0_3, %c0_4], %11 {strides = array<i32>} : memref<128x128xbf16, #tpu.memory_space<vmem>>, vector<128x128xbf16>,
    return
  }
  func.func @transform_0(%arg0: i32) -> (i32, i32) {
    %c0_i32 = arith.constant 0 : i32
    %c0_i32_0 = arith.constant 0 : i32
    return %arg0, %c0_i32 : i32, i32
  }
  func.func @transform_1(%arg0: i32) -> (i32, i32) {
    %c0_i32 = arith.constant 0 : i32
    %c0_i32_0 = arith.constant 0 : i32
    return %arg0, %c0_i32 : i32, i32
  }
}

</mosaic_0001>

<llo_original>
// kernel: tpu_custom_call.1
$region0: #{tpu_custom_call.1}
  #allocation0 [shape = 'u32[]', space=smem, size = 0x4, offset = 0x4, fixed_abs, tag = 'smem constant byte address 0x4 - core index']
  #allocation1 [shape = 'u32[72,128]{1,0:T(1,128)}', space=vmem, size = 0x9000, scoped, tag = 'internal scratch']
  %s0 = inlined_call_operand.hbm [shape: f32[128,128], index: 0, kind: input, shape index: {}]
  %s1 = inlined_call_operand.hbm [shape: bf16[128,128], index: 1, kind: output, shape index: {}]
  %s2 = sld [smem:[#allocation0]]
  $region18: #{tpu_custom_call.1} parent=0
    _
  %s4 = ssub.s32 1, %s2
  %s5 = scalar_select 0, %s4, %s2
  $region1: #{tpu_custom_call.1} parent=0
    #allocation2 [shape = 'u8[65536]{0}', space=vmem, size = 0x10000, scoped, tag = 'input window, operand 0, single buffered']
    #allocation3 [shape = 's32[1]{0}', space=sflag, size = 0x4, scoped, tag = 'scoped memory for tpu_custom_call.1']
    #allocation4 [shape = 's32[1]{0}', space=sflag, size = 0x4, scoped, tag = 'scoped memory for tpu_custom_call.1']
    #allocation5 [shape = 'u8[32768]{0}', space=vmem, size = 0x8000, scoped, tag = 'output window, operand 0, single buffered']
    %6 = vsyncpa [#allocation3], 0
    %7 = vsyncpa [#allocation4], 0
    // Predicated region
    $region2: #{tpu_custom_call.1} parent=1 // pred_check
      _
    $region3: #{tpu_custom_call.1} parent=1 // pred_check_branch
      %9 = sbr.rel (0) target = $region5
    $region4: #{tpu_custom_call.1} parent=1 // pred_region
      %11 = vsyncadd [#allocation3], 0
      %s12 = sshll.u32 %s0, 4
      %s13 = int_to_ptr.hbm [resolvable:$true] %s12
      %s14 = sshll.u32 [#allocation2], 4
      %s15 = int_to_ptr.vmem [resolvable:$true] %s14
      %20 = dma.hbm_to_vmem [thread:$0]  %s13, 2048, %s15, [#allocation3], 128, 128, 8
    $region5: #{tpu_custom_call.1} parent=1 // pred_fallthru
      _
    // Predicated region
    $region6: #{tpu_custom_call.1} parent=1 // pred_check
      _
    $region7: #{tpu_custom_call.1} parent=1 // pred_check_branch
      %22 = sbr.rel (0) target = $region9
    $region8: #{tpu_custom_call.1} parent=1 // pred_region
      %24 = dma.done [#allocation3], 2048
    $region9: #{tpu_custom_call.1} parent=1 // pred_fallthru
      _
    %v25 = vld [vmem:[#allocation2] sm:$0xff]
    %v26 = vld [vmem:[#allocation2 + $0x8] sm:$0xff]
    %v27 = vld [vmem:[#allocation2 + $0x10] sm:$0xff]
    %v28 = vld [vmem:[#allocation2 + $0x18] sm:$0xff]
    %v29 = vld [vmem:[#allocation2 + $0x20] sm:$0xff]
    %v30 = vld [vmem:[#allocation2 + $0x28] sm:$0xff]
    %v31 = vld [vmem:[#allocation2 + $0x30] sm:$0xff]
    %v32 = vld [vmem:[#allocation2 + $0x38] sm:$0xff]
    %v33 = vld [vmem:[#allocation2 + $0x40] sm:$0xff]
    %v34 = vld [vmem:[#allocation2 + $0x48] sm:$0xff]
    %v35 = vld [vmem:[#allocation2 + $0x50] sm:$0xff]
    %v36 = vld [vmem:[#allocation2 + $0x58] sm:$0xff]
    %v37 = vld [vmem:[#allocation2 + $0x60] sm:$0xff]
    %v38 = vld [vmem:[#allocation2 + $0x68] sm:$0xff]
    %v39 = vld [vmem:[#allocation2 + $0x70] sm:$0xff]
    %v40 = vld [vmem:[#allocation2 + $0x78] sm:$0xff]
    %v41 = vmul.f32 %v25, %v25
    %v42 = vmul.f32 %v26, %v26
    %v43 = vmul.f32 %v27, %v27
    %v44 = vmul.f32 %v28, %v28
    %v45 = vmul.f32 %v29, %v29
    %v46 = vmul.f32 %v30, %v30
    %v47 = vmul.f32 %v31, %v31
    %v48 = vmul.f32 %v32, %v32
    %v49 = vmul.f32 %v33, %v33
    %v50 = vmul.f32 %v34, %v34
    %v51 = vmul.f32 %v35, %v35
    %v52 = vmul.f32 %v36, %v36
    %v53 = vmul.f32 %v37, %v37
    %v54 = vmul.f32 %v38, %v38
    %v55 = vmul.f32 %v39, %v39
    %v56 = vmul.f32 %v40, %v40
    %57 = vadd.xlane.f32.xlu0 %v41
    %v58 = vpop.xlane.xlu0 %57
    %59 = vadd.xlane.f32.xlu0 %v42
    %v60 = vpop.xlane.xlu0 %59
    %61 = vadd.xlane.f32.xlu0 %v43
    %v62 = vpop.xlane.xlu0 %61
    %63 = vadd.xlane.f32.xlu0 %v44
    %v64 = vpop.xlane.xlu0 %63
    %65 = vadd.xlane.f32.xlu0 %v45
    %v66 = vpop.xlane.xlu0 %65
    %67 = vadd.xlane.f32.xlu0 %v46
    %v68 = vpop.xlane.xlu0 %67
    %69 = vadd.xlane.f32.xlu0 %v47
    %v70 = vpop.xlane.xlu0 %69
    %71 = vadd.xlane.f32.xlu0 %v48
    %v72 = vpop.xlane.xlu0 %71
    %73 = vadd.xlane.f32.xlu0 %v49
    %v74 = vpop.xlane.xlu0 %73
    %75 = vadd.xlane.f32.xlu0 %v50
    %v76 = vpop.xlane.xlu0 %75
    %77 = vadd.xlane.f32.xlu0 %v51
    %v78 = vpop.xlane.xlu0 %77
    %79 = vadd.xlane.f32.xlu0 %v52
    %v80 = vpop.xlane.xlu0 %79
    %81 = vadd.xlane.f32.xlu0 %v53
    %v82 = vpop.xlane.xlu0 %81
    %83 = vadd.xlane.f32.xlu0 %v54
    %v84 = vpop.xlane.xlu0 %83
    %85 = vadd.xlane.f32.xlu0 %v55
    %v86 = vpop.xlane.xlu0 %85
    %87 = vadd.xlane.f32.xlu0 %v56
    %v88 = vpop.xlane.xlu0 %87
    %v89 = vmax.f32 %v58, 1e-24
    %v90 = vmax.f32 %v60, 1e-24
    %v91 = vmax.f32 %v62, 1e-24
    %v92 = vmax.f32 %v64, 1e-24
    %v93 = vmax.f32 %v66, 1e-24
    %v94 = vmax.f32 %v68, 1e-24
    %v95 = vmax.f32 %v70, 1e-24
    %v96 = vmax.f32 %v72, 1e-24
    %v97 = vmax.f32 %v74, 1e-24
    %v98 = vmax.f32 %v76, 1e-24
    %v99 = vmax.f32 %v78, 1e-24
    %v100 = vmax.f32 %v80, 1e-24
    %v101 = vmax.f32 %v82, 1e-24
    %v102 = vmax.f32 %v84, 1e-24
    %v103 = vmax.f32 %v86, 1e-24
    %v104 = vmax.f32 %v88, 1e-24
    %v105 = vrsqrt.pop %v89
    %v106 = vmul.f32 %v105, %v89
    %v107 = vmul.f32 %v106, %v105
    %v108 = vmul.f32 0.5, %v107
    %v109 = vsub.f32 1.5, %v108
    %v110 = vmul.f32 %v105, %v109
    %vm111 = vweird.f32 %v89
    %vm112 = vweird.f32 %v105
    %vm113 = vmor %vm111, %vm112
    %v114 = vsel %vm113, %v105, %v110
    %v115 = vrsqrt.pop %v90
    %v116 = vmul.f32 %v115, %v90
    %v117 = vmul.f32 %v116, %v115
    %v118 = vmul.f32 0.5, %v117
    %v119 = vsub.f32 1.5, %v118
    %v120 = vmul.f32 %v115, %v119
    %vm121 = vweird.f32 %v90
    %vm122 = vweird.f32 %v115
    %vm123 = vmor %vm121, %vm122
    %v124 = vsel %vm123, %v115, %v120
    %v125 = vrsqrt.pop %v91
    %v126 = vmul.f32 %v125, %v91
    %v127 = vmul.f32 %v126, %v125
    %v128 = vmul.f32 0.5, %v127
    %v129 = vsub.f32 1.5, %v128
    %v130 = vmul.f32 %v125, %v129
    %vm131 = vweird.f32 %v91
    %vm132 = vweird.f32 %v125
    %vm133 = vmor %vm131, %vm132
    %v134 = vsel %vm133, %v125, %v130
    %v135 = vrsqrt.pop %v92
    %v136 = vmul.f32 %v135, %v92
    %v137 = vmul.f32 %v136, %v135
    %v138 = vmul.f32 0.5, %v137
    %v139 = vsub.f32 1.5, %v138
    %v140 = vmul.f32 %v135, %v139
    %vm141 = vweird.f32 %v92
    %vm142 = vweird.f32 %v135
    %vm143 = vmor %vm141, %vm142
    %v144 = vsel %vm143, %v135, %v140
    %v145 = vrsqrt.pop %v93
    %v146 = vmul.f32 %v145, %v93
    %v147 = vmul.f32 %v146, %v145
    %v148 = vmul.f32 0.5, %v147
    %v149 = vsub.f32 1.5, %v148
    %v150 = vmul.f32 %v145, %v149
    %vm151 = vweird.f32 %v93
    %vm152 = vweird.f32 %v145
    %vm153 = vmor %vm151, %vm152
    %v154 = vsel %vm153, %v145, %v150
    %v155 = vrsqrt.pop %v94
    %v156 = vmul.f32 %v155, %v94
    %v157 = vmul.f32 %v156, %v155
    %v158 = vmul.f32 0.5, %v157
    %v159 = vsub.f32 1.5, %v158
    %v160 = vmul.f32 %v155, %v159
    %vm161 = vweird.f32 %v94
    %vm162 = vweird.f32 %v155
    %vm163 = vmor %vm161, %vm162
    %v164 = vsel %vm163, %v155, %v160
    %v165 = vrsqrt.pop %v95
    %v166 = vmul.f32 %v165, %v95
    %v167 = vmul.f32 %v166, %v165
    %v168 = vmul.f32 0.5, %v167
    %v169 = vsub.f32 1.5, %v168
    %v170 = vmul.f32 %v165, %v169
    %vm171 = vweird.f32 %v95
    %vm172 = vweird.f32 %v165
    %vm173 = vmor %vm171, %vm172
    %v174 = vsel %vm173, %v165, %v170
    %v175 = vrsqrt.pop %v96
    %v176 = vmul.f32 %v175, %v96
    %v177 = vmul.f32 %v176, %v175
    %v178 = vmul.f32 0.5, %v177
    %v179 = vsub.f32 1.5, %v178
    %v180 = vmul.f32 %v175, %v179
    %vm181 = vweird.f32 %v96
    %vm182 = vweird.f32 %v175
    %vm183 = vmor %vm181, %vm182
    %v184 = vsel %vm183, %v175, %v180
    %v185 = vrsqrt.pop %v97
    %v186 = vmul.f32 %v185, %v97
    %v187 = vmul.f32 %v186, %v185
    %v188 = vmul.f32 0.5, %v187
    %v189 = vsub.f32 1.5, %v188
    %v190 = vmul.f32 %v185, %v189
    %vm191 = vweird.f32 %v97
    %vm192 = vweird.f32 %v185
    %vm193 = vmor %vm191, %vm192
    %v194 = vsel %vm193, %v185, %v190
    %v195 = vrsqrt.pop %v98
    %v196 = vmul.f32 %v195, %v98
    %v197 = vmul.f32 %v196, %v195
    %v198 = vmul.f32 0.5, %v197
    %v199 = vsub.f32 1.5, %v198
    %v200 = vmul.f32 %v195, %v199
    %vm201 = vweird.f32 %v98
    %vm202 = vweird.f32 %v195
    %vm203 = vmor %vm201, %vm202
    %v204 = vsel %vm203, %v195, %v200
    %v205 = vrsqrt.pop %v99
    %v206 = vmul.f32 %v205, %v99
    %v207 = vmul.f32 %v206, %v205
    %v208 = vmul.f32 0.5, %v207
    %v209 = vsub.f32 1.5, %v208
    %v210 = vmul.f32 %v205, %v209
    %vm211 = vweird.f32 %v99
    %vm212 = vweird.f32 %v205
    %vm213 = vmor %vm211, %vm212
    %v214 = vsel %vm213, %v205, %v210
    %v215 = vrsqrt.pop %v100
    %v216 = vmul.f32 %v215, %v100
    %v217 = vmul.f32 %v216, %v215
    %v218 = vmul.f32 0.5, %v217
    %v219 = vsub.f32 1.5, %v218
    %v220 = vmul.f32 %v215, %v219
    %vm221 = vweird.f32 %v100
    %vm222 = vweird.f32 %v215
    %vm223 = vmor %vm221, %vm222
    %v224 = vsel %vm223, %v215, %v220
    %v225 = vrsqrt.pop %v101
    %v226 = vmul.f32 %v225, %v101
    %v227 = vmul.f32 %v226, %v225
    %v228 = vmul.f32 0.5, %v227
    %v229 = vsub.f32 1.5, %v228
    %v230 = vmul.f32 %v225, %v229
    %vm231 = vweird.f32 %v101
    %vm232 = vweird.f32 %v225
    %vm233 = vmor %vm231, %vm232
    %v234 = vsel %vm233, %v225, %v230
    %v235 = vrsqrt.pop %v102
    %v236 = vmul.f32 %v235, %v102
    %v237 = vmul.f32 %v236, %v235
    %v238 = vmul.f32 0.5, %v237
    %v239 = vsub.f32 1.5, %v238
    %v240 = vmul.f32 %v235, %v239
    %vm241 = vweird.f32 %v102
    %vm242 = vweird.f32 %v235
    %vm243 = vmor %vm241, %vm242
    %v244 = vsel %vm243, %v235, %v240
    %v245 = vrsqrt.pop %v103
    %v246 = vmul.f32 %v245, %v103
    %v247 = vmul.f32 %v246, %v245
    %v248 = vmul.f32 0.5, %v247
    %v249 = vsub.f32 1.5, %v248
    %v250 = vmul.f32 %v245, %v249
    %vm251 = vweird.f32 %v103
    %vm252 = vweird.f32 %v245
    %vm253 = vmor %vm251, %vm252
    %v254 = vsel %vm253, %v245, %v250
    %v255 = vrsqrt.pop %v104
    %v256 = vmul.f32 %v255, %v104
    %v257 = vmul.f32 %v256, %v255
    %v258 = vmul.f32 0.5, %v257
    %v259 = vsub.f32 1.5, %v258
    %v260 = vmul.f32 %v255, %v259
    %vm261 = vweird.f32 %v104
    %vm262 = vweird.f32 %v255
    %vm263 = vmor %vm261, %vm262
    %v264 = vsel %vm263, %v255, %v260
    %v265 = vmul.f32 %v114, 3.7796447
    %v266 = vmul.f32 %v124, 3.7796447
    %v267 = vmul.f32 %v134, 3.7796447
    %v268 = vmul.f32 %v144, 3.7796447
    %v269 = vmul.f32 %v154, 3.7796447
    %v270 = vmul.f32 %v164, 3.7796447
    %v271 = vmul.f32 %v174, 3.7796447
    %v272 = vmul.f32 %v184, 3.7796447
    %v273 = vmul.f32 %v194, 3.7796447
    %v274 = vmul.f32 %v204, 3.7796447
    %v275 = vmul.f32 %v214, 3.7796447
    %v276 = vmul.f32 %v224, 3.7796447
    %v277 = vmul.f32 %v234, 3.7796447
    %v278 = vmul.f32 %v244, 3.7796447
    %v279 = vmul.f32 %v254, 3.7796447
    %v280 = vmul.f32 %v264, 3.7796447
    %v281 = vmul.f32 %v25, %v265
    %v282 = vmul.f32 %v26, %v266
    %v283 = vmul.f32 %v27, %v267
    %v284 = vmul.f32 %v28, %v268
    %v285 = vmul.f32 %v29, %v269
    %v286 = vmul.f32 %v30, %v270
    %v287 = vmul.f32 %v31, %v271
    %v288 = vmul.f32 %v32, %v272
    %v289 = vmul.f32 %v33, %v273
    %v290 = vmul.f32 %v34, %v274
    %v291 = vmul.f32 %v35, %v275
    %v292 = vmul.f32 %v36, %v276
    %v293 = vmul.f32 %v37, %v277
    %v294 = vmul.f32 %v38, %v278
    %v295 = vmul.f32 %v39, %v279
    %v296 = vmul.f32 %v40, %v280
    %v297 = vpack.c.bf16 %v281, %v281
    %v298 = vpack.c.bf16 %v282, %v282
    %v299 = vpack.c.bf16 %v283, %v283
    %v300 = vpack.c.bf16 %v284, %v284
    %v301 = vpack.c.bf16 %v285, %v285
    %v302 = vpack.c.bf16 %v286, %v286
    %v303 = vpack.c.bf16 %v287, %v287
    %v304 = vpack.c.bf16 %v288, %v288
    %v305 = vpack.c.bf16 %v289, %v289
    %v306 = vpack.c.bf16 %v290, %v290
    %v307 = vpack.c.bf16 %v291, %v291
    %v308 = vpack.c.bf16 %v292, %v292
    %v309 = vpack.c.bf16 %v293, %v293
    %v310 = vpack.c.bf16 %v294, %v294
    %v311 = vpack.c.bf16 %v295, %v295
    %v312 = vpack.c.bf16 %v296, %v296
    %313 = vst [vmem:[#allocation5] sm:$0xf] %v297
    %314 = vst [vmem:[#allocation5 + $0x4] sm:$0xf] %v298
    %315 = vst [vmem:[#allocation5 + $0x8] sm:$0xf] %v299
    %316 = vst [vmem:[#allocation5 + $0xc] sm:$0xf] %v300
    %317 = vst [vmem:[#allocation5 + $0x10] sm:$0xf] %v301
    %318 = vst [vmem:[#allocation5 + $0x14] sm:$0xf] %v302
    %319 = vst [vmem:[#allocation5 + $0x18] sm:$0xf] %v303
    %320 = vst [vmem:[#allocation5 + $0x1c] sm:$0xf] %v304
    %321 = vst [vmem:[#allocation5 + $0x20] sm:$0xf] %v305
    %322 = vst [vmem:[#allocation5 + $0x24] sm:$0xf] %v306
    %323 = vst [vmem:[#allocation5 + $0x28] sm:$0xf] %v307
    %324 = vst [vmem:[#allocation5 + $0x2c] sm:$0xf] %v308
    %325 = vst [vmem:[#allocation5 + $0x30] sm:$0xf] %v309
    %326 = vst [vmem:[#allocation5 + $0x34] sm:$0xf] %v310
    %327 = vst [vmem:[#allocation5 + $0x38] sm:$0xf] %v311
    %328 = vst [vmem:[#allocation5 + $0x3c] sm:$0xf] %v312
    // Predicated region
    $region10: #{tpu_custom_call.1} parent=1 // pred_check
      _
    $region11: #{tpu_custom_call.1} parent=1 // pred_check_branch
      %330 = sbr.rel (0) target = $region13
    $region12: #{tpu_custom_call.1} parent=1 // pred_region
      %332 = vsyncadd [#allocation4], 0
      %s333 = sshll.u32 [#allocation5], 4
      %s334 = int_to_ptr.vmem [resolvable:$true] %s333
      %s335 = sshll.u32 %s1, 4
      %s336 = int_to_ptr.hbm [resolvable:$true] %s335
      %341 = dma.vmem_to_hbm [thread:$0]  %s334, 1024, %s336, [#allocation4], 64, 64, 4
    $region13: #{tpu_custom_call.1} parent=1 // pred_fallthru
      _
    // Predicated region
    $region14: #{tpu_custom_call.1} parent=1 // pred_check
      _
    $region15: #{tpu_custom_call.1} parent=1 // pred_check_branch
      %343 = sbr.rel (0) target = $region17
    $region16: #{tpu_custom_call.1} parent=1 // pred_region
      %345 = dma.done [#allocation4], 1024
    $region17: #{tpu_custom_call.1} parent=1 // pred_fallthru
      _
    %346 = vsyncpa [#allocation3], 1
    %347 = vsyncpa [#allocation4], 1

</llo_original>
